<compile_context>
chip_gen: v7x
topology: tpu7x:2x2x1
jax: 0.10.0
libtpu: 0.0.40
codegen_flags: <defaults>
</compile_context>

<pallas_src>
import jax
import jax.numpy as jnp
from jax.experimental import pallas as pl
from jax.experimental.pallas import tpu as pltpu


def _rope_cache_kernel(inv_freq_ref, sincos_ref, cos_ref, sin_ref):
    # inv_freq_ref: [1, half]      float32
    # outputs     : [TILE_S, dim]  float32 (dim = 2 * half)
    tile_s = sincos_ref.shape[0]
    half = inv_freq_ref.shape[-1]

    # Positions for this tile, generated on-core (no [S, 1] operand).
    row = jax.lax.broadcasted_iota(jnp.int32, (tile_s, half), 0)
    pos = (row + pl.program_id(0) * tile_s).astype(jnp.float32)   # [TILE_S, half]

    freqs = pos * inv_freq_ref[...]                               # outer product, VPU
    s = jnp.sin(freqs)                                            # EUP
    c = jnp.cos(freqs)                                            # EUP

    # Single wide (lane-dense when half >= 64) store per output per tile.
    sincos_ref[...] = jnp.concatenate([s, c], axis=-1)            # torch.cat((sin, cos), 1)
    cos_ref[...] = jnp.concatenate([c, c], axis=-1)               # cos(cat(freqs, freqs, -1))
    sin_ref[...] = jnp.concatenate([s, s], axis=-1)               # sin(cat(freqs, freqs, -1))


def _choose_tile_s(seq_len: int, max_tile: int = 1024) -> int:
    # Sublane dim must be a multiple of 8 (or the full extent). 1024 rows keeps the
    # kernel near the HBM-store roofline (fewer grid steps) while
    # 3 outputs x 2 buffers x TILE_S x dim x 4B stays far under the scoped VMEM
    # default on v5e/v6e/v7x (dim=128 -> 3 MiB).
    if seq_len <= max_tile:
        return max(8, ((seq_len + 7) // 8) * 8)
    return max_tile


def _build_rope_cache(seq_len: int, dim: int, base: float = 10000.0):
    half = dim // 2
    inv_freq = 1.0 / (base ** (jnp.arange(0, dim, 2, dtype=jnp.float32) / dim))  # [half]
    inv2 = inv_freq[None, :]                                                     # [1, half]

    tile_s = _choose_tile_s(seq_len)
    grid = (pl.cdiv(seq_len, tile_s),)

    out_shape = (
        jax.ShapeDtypeStruct((seq_len, dim), jnp.float32),  # sin_cos
        jax.ShapeDtypeStruct((seq_len, dim), jnp.float32),  # cos (pre-reshape)
        jax.ShapeDtypeStruct((seq_len, dim), jnp.float32),  # sin (pre-reshape)
    )

    cost = pl.CostEstimate(
        flops=seq_len * half,                         # the outer-product multiply
        transcendentals=2 * seq_len * half,           # sin + cos (computed once each)
        bytes_accessed=3 * seq_len * dim * 4 + half * 4,
    )

    sin_cos, cos2d, sin2d = pl.pallas_call(
        _rope_cache_kernel,
        out_shape=out_shape,
        grid=grid,
        in_specs=[
            # Same tiny [1, half] block every grid step.
            pl.BlockSpec((1, half), lambda i: (0, 0)),
        ],
        out_specs=(
            pl.BlockSpec((tile_s, dim), lambda i: (i, 0)),
            pl.BlockSpec((tile_s, dim), lambda i: (i, 0)),
            pl.BlockSpec((tile_s, dim), lambda i: (i, 0)),
        ),
        compiler_params=pltpu.CompilerParams(
            dimension_semantics=("parallel",),
        ),
        cost_estimate=cost,
    )(inv2)

    cos_cached = cos2d[None, None, :, :]   # [1, 1, S, dim]
    sin_cached = sin2d[None, None, :, :]   # [1, 1, S, dim]
    return sin_cos, cos_cached, sin_cached


class RotaryEmbedding:
    """JAX/Pallas port of ipex RotaryEmbedding. forward(seq_len) returns
    (sin_cos, cos_cached, sin_cached) with torch-equivalent semantics."""

    def __init__(self, max_position_embeddings: int, dim: int, base: float = 10000.0):
        self.dim = dim
        self.base = base
        self.max_seq_len_cached = max_position_embeddings
        self.sin_cos, self.cos_cached, self.sin_cached = _build_rope_cache(
            max_position_embeddings, dim, base
        )

    def forward(self, seq_len=None):
        if seq_len is not None and seq_len > self.max_seq_len_cached:
            self.max_seq_len_cached = seq_len
            self.sin_cos, self.cos_cached, self.sin_cached = _build_rope_cache(
                seq_len, self.dim, self.base
            )
        return (self.sin_cos, self.cos_cached, self.sin_cached)

    __call__ = forward


if __name__ == "__main__":
    # Small deterministic config consistent with the module's __init__.
    max_position_embeddings = 16
    dim = 32
    base = 10000.0

    # (PRNGKey unused — the module's buffers are fully deterministic functions of
    #  (max_position_embeddings, dim, base); key kept per harness spec.)
    _ = jax.random.PRNGKey(0)

    rope = RotaryEmbedding(max_position_embeddings, dim, base)
    sin_cos, cos_cached, sin_cached = rope.forward(seq_len=8)  # 8 <= cached, no regrow
    jax.block_until_ready((sin_cos, cos_cached, sin_cached))

    # Reference check in plain JAX (same math as the torch module).
    inv_freq = 1.0 / (base ** (jnp.arange(0, dim, 2, dtype=jnp.float32) / dim))
    t = jnp.arange(max_position_embeddings, dtype=jnp.float32)
    freqs = jnp.einsum("i,j->ij", t, inv_freq)
    ref_sin_cos = jnp.concatenate([jnp.sin(freqs), jnp.cos(freqs)], axis=1)
    emb = jnp.concatenate([freqs, freqs], axis=-1)
    ref_cos = jnp.cos(emb)[None, None, :, :]
    ref_sin = jnp.sin(emb)[None, None, :, :]

    assert sin_cos.shape == (max_position_embeddings, dim)
    assert cos_cached.shape == (1, 1, max_position_embeddings, dim)
    assert sin_cached.shape == (1, 1, max_position_embeddings, dim)
    assert jnp.allclose(sin_cos, ref_sin_cos, atol=1e-5)
    assert jnp.allclose(cos_cached, ref_cos, atol=1e-5)
    assert jnp.allclose(sin_cached, ref_sin, atol=1e-5)

    # Sanity-check the tiled path (seq > one tile, tail block handled by padding):
    # S=2080 -> grid of 3 tiles of 1024 rows, dim=128 -> lane-dense stores.
    S2, D2 = 2080, 128
    rope2 = RotaryEmbedding(S2, D2, base)
    sc2, cc2, ss2 = rope2.forward()
    jax.block_until_ready((sc2, cc2, ss2))
    inv2 = 1.0 / (base ** (jnp.arange(0, D2, 2, dtype=jnp.float32) / D2))
    f2 = jnp.einsum("i,j->ij", jnp.arange(S2, dtype=jnp.float32), inv2)
    assert jnp.allclose(sc2, jnp.concatenate([jnp.sin(f2), jnp.cos(f2)], axis=1),
                        atol=1e-4, rtol=1e-4)
    e2 = jnp.concatenate([f2, f2], axis=-1)
    assert jnp.allclose(cc2[0, 0], jnp.cos(e2), atol=1e-4, rtol=1e-4)
    assert jnp.allclose(ss2[0, 0], jnp.sin(e2), atol=1e-4, rtol=1e-4)

    print("KERNEL_OK")
</pallas_src>

<mosaic_0001>
module attributes {stable_mosaic.version = 11 : i64} {
  func.func @_rope_cache_kernel(%arg0: i32, %arg1: memref<1x16xf32, #tpu.memory_space<vmem>>, %arg2: memref<16x32xf32, #tpu.memory_space<vmem>>, %arg3: memref<16x32xf32, #tpu.memory_space<vmem>>, %arg4: memref<16x32xf32, #tpu.memory_space<vmem>>) attributes {dimension_semantics = [#tpu.dimension_semantics<parallel>], iteration_bounds = array<i64: 1>, scalar_prefetch = 0 : i64, scratch_operands = 0 : i64, tpu.core_type = #tpu.core_type<tc>, window_params = [{pipeline_mode = #tpu.pipeline_mode<synchronous>, transform_indices = @transform_0, window_bounds = array<i64: 1, 16>}, {transform_indices = @transform_1, window_bounds = array<i64: 16, 32>}, {transform_indices = @transform_2, window_bounds = array<i64: 16, 32>}, {transform_indices = @transform_3, window_bounds = array<i64: 16, 32>}]} {
    %0 = tpu.iota {dimensions = array<i32: 0>} : vector<16x16xi32>
    %c16_i32 = arith.constant 16 : i32
    %1 = arith.muli %arg0, %c16_i32 : i32
    %2 = vector.broadcast %1 : i32 to vector<16x16xi32>
    %3 = arith.addi %0, %2 : vector<16x16xi32>
    %4 = arith.sitofp %3 : vector<16x16xi32> to vector<16x16xf32>
    %c0 = arith.constant 0 : index
    %c0_0 = arith.constant 0 : index
    %5 = vector.load %arg1[%c0, %c0_0] : memref<1x16xf32, #tpu.memory_space<vmem>>, vector<1x16xf32>
    %6 = vector.broadcast %5 : vector<1x16xf32> to vector<16x16xf32>
    %7 = arith.mulf %4, %6 : vector<16x16xf32>
    %8 = math.sin %7 : vector<16x16xf32>
    %9 = math.cos %7 : vector<16x16xf32>
    %10 = tpu.concatenate %8, %9 in 1 : vector<16x16xf32>, vector<16x16xf32> -> vector<16x32xf32>
    %c0_1 = arith.constant 0 : index
    %c0_2 = arith.constant 0 : index
    %11 = vector.load %arg2[%c0_1, %c0_2] : memref<16x32xf32, #tpu.memory_space<vmem>>, vector<16x32xf32>
    tpu.vector_store %arg2[%c0_1, %c0_2], %10 {strides = array<i32>} : memref<16x32xf32, #tpu.memory_space<vmem>>, vector<16x32xf32>,
    %12 = tpu.concatenate %9, %9 in 1 : vector<16x16xf32>, vector<16x16xf32> -> vector<16x32xf32>
    %c0_3 = arith.constant 0 : index
    %c0_4 = arith.constant 0 : index
    %13 = vector.load %arg3[%c0_3, %c0_4] : memref<16x32xf32, #tpu.memory_space<vmem>>, vector<16x32xf32>
    tpu.vector_store %arg3[%c0_3, %c0_4], %12 {strides = array<i32>} : memref<16x32xf32, #tpu.memory_space<vmem>>, vector<16x32xf32>,
    %14 = tpu.concatenate %8, %8 in 1 : vector<16x16xf32>, vector<16x16xf32> -> vector<16x32xf32>
    %c0_5 = arith.constant 0 : index
    %c0_6 = arith.constant 0 : index
    %15 = vector.load %arg4[%c0_5, %c0_6] : memref<16x32xf32, #tpu.memory_space<vmem>>, vector<16x32xf32>
    tpu.vector_store %arg4[%c0_5, %c0_6], %14 {strides = array<i32>} : memref<16x32xf32, #tpu.memory_space<vmem>>, vector<16x32xf32>,
    return
  }
  func.func @transform_0(%arg0: i32) -> (i32, i32) {
    %c0_i32 = arith.constant 0 : i32
    %c0_i32_0 = arith.constant 0 : i32
    %c0_i32_1 = arith.constant 0 : i32
    return %c0_i32, %c0_i32_0 : i32, i32
  }
  func.func @transform_1(%arg0: i32) -> (i32, i32) {
    %c0_i32 = arith.constant 0 : i32
    %c0_i32_0 = arith.constant 0 : i32
    return %arg0, %c0_i32 : i32, i32
  }
  func.func @transform_2(%arg0: i32) -> (i32, i32) {
    %c0_i32 = arith.constant 0 : i32
    %c0_i32_0 = arith.constant 0 : i32
    return %arg0, %c0_i32 : i32, i32
  }
  func.func @transform_3(%arg0: i32) -> (i32, i32) {
    %c0_i32 = arith.constant 0 : i32
    %c0_i32_0 = arith.constant 0 : i32
    return %arg0, %c0_i32 : i32, i32
  }
}

</mosaic_0001>

<llo_original>
// kernel: tpu_custom_call.1
$region0: #{tpu_custom_call.1}
  #allocation0 [shape = 'u32[]', space=smem, size = 0x4, offset = 0x4, fixed_abs, tag = 'smem constant byte address 0x4 - core index']
  #allocation1 [shape = 'u32[144,128]{1,0:T(1,128)}', space=vmem, size = 0x12000, scoped, tag = 'internal scratch']
  %s0 = inlined_call_operand.hbm [shape: f32[1,16], index: 0, kind: input, shape index: {}]
  %s1 = inlined_call_operand.hbm [shape: f32[16,32], index: 1, kind: output, shape index: {0}]
  %s2 = inlined_call_operand.hbm [shape: f32[16,32], index: 2, kind: output, shape index: {1}]
  %s3 = inlined_call_operand.hbm [shape: f32[16,32], index: 3, kind: output, shape index: {2}]
  %4 = xla_tuple %s1, %s2, %s3
  %s5 = sld [smem:[#allocation0]]
  $region34: #{tpu_custom_call.1} parent=0
    _
  %s7 = ssub.s32 1, %s5
  %s8 = scalar_select 0, %s7, %s5
  $region1: #{tpu_custom_call.1} parent=0
    #allocation2 [shape = 'u8[512]{0}', space=vmem, size = 0x400, scoped, tag = 'input window, operand 0, single buffered']
    #allocation3 [shape = 's32[1]{0}', space=sflag, size = 0x4, scoped, tag = 'scoped memory for tpu_custom_call.1']
    #allocation4 [shape = 's32[1]{0}', space=sflag, size = 0x4, scoped, tag = 'scoped memory for tpu_custom_call.1']
    #allocation5 [shape = 'u8[8192]{0}', space=vmem, size = 0x2000, scoped, tag = 'output window, operand 0, single buffered']
    #allocation6 [shape = 'u8[8192]{0}', space=vmem, size = 0x2000, scoped, tag = 'output window, operand 1, single buffered']
    #allocation7 [shape = 's32[1]{0}', space=sflag, size = 0x4, scoped, tag = 'scoped memory for tpu_custom_call.1']
    #allocation8 [shape = 'u8[8192]{0}', space=vmem, size = 0x2000, scoped, tag = 'output window, operand 2, single buffered']
    %9 = vsyncpa [#allocation3], 0
    %10 = vsyncpa [#allocation4], 0
    %11 = vsyncpa [#allocation7], 0
    // Predicated region
    $region2: #{tpu_custom_call.1} parent=1 // pred_check
      _
    $region3: #{tpu_custom_call.1} parent=1 // pred_check_branch
      %13 = sbr.rel (0) target = $region5
    $region4: #{tpu_custom_call.1} parent=1 // pred_region
      %s15 = ssub.s32 16, 16
      %16 = vsyncadd [#allocation3], %s15
      %s18 = sshll.u32 [#allocation2], 4
      %s19 = int_to_ptr.vmem [resolvable:$true] %s18
      %21 = dma.hbm_to_vmem [thread:$0]  %s0, 16, %s19, [#allocation3]
    $region5: #{tpu_custom_call.1} parent=1 // pred_fallthru
      _
    // Predicated region
    $region6: #{tpu_custom_call.1} parent=1 // pred_check
      _
    $region7: #{tpu_custom_call.1} parent=1 // pred_check_branch
      %23 = sbr.rel (0) target = $region9
    $region8: #{tpu_custom_call.1} parent=1 // pred_region
      %24 = dma.done [#allocation3], 16
    $region9: #{tpu_custom_call.1} parent=1 // pred_fallthru
      _
    %v25 = vlaneseq
    %v26 = vshrl.u32 %v25, 7
    %v27 = vadd.s32 %v26, 8
    %s28 = smul.u32 0, 16
    %v29 = vstv %s28
    %v30 = vadd.s32 %v26, %v29
    %v31 = vadd.s32 %v27, %v29
    %v32 = vcvt.s32.f32 %v30
    %v33 = vcvt.s32.f32 %v31
    %v34 = vld [vmem:[#allocation2] sm:$0x1]
    %v36 = vlaneseq
    %v37 = vshrl.u32 %v36, 7
    %v38 = vsub.s32 0, %v37
    %v39 = vrot.slane %v34, %v38
    %v41 = vmul.f32 %v32, %v39
    %v42 = vmul.f32 %v33, %v39
    %v43 = vand.u32 2147483647, %v41
    %vm44 = vcmp.le.f32.partialorder %v43, 0.7853982
    %vm45 = vcmp.lt.s32.totalorder %v41, 0
    %v46 = vand.u32 %v41, 2139095040
    %v47 = vshrl.u32 %v46, 23
    %v48 = vsub.s32 %v47, 127
    %v49 = vand.u32 2147483647, %v41
    %v50 = vand.u32 %v49, 8388607
    %v51 = vor.u32 %v50, 8388608
    %v52 = vsub.s32 0, %v51
    %v53 = vadd.s32 %v48, 1
    %vm54 = vcmp.gt.s32.totalorder %v53, 0
    %v55 = vsel %vm54, %v53, 0
    %v56 = vshrl.u32 %v55, 5
    %v57 = vand.u32 %v55, 31
    %v58 = vsub.s32 32, %v57
    %v59 = vshrl.u32 683565275, %v58
    %v60 = vshll.u32 683565275, %v57
    %v61 = vshrl.u32 2475754826, %v58
    %v62 = vor.u32 %v60, %v61
    %v63 = vshll.u32 2475754826, %v57
    %v64 = vshrl.u32 2131351028, %v58
    %v65 = vor.u32 %v63, %v64
    %v66 = vshll.u32 2131351028, %v57
    %v67 = vshrl.u32 2102212464, %v58
    %v68 = vor.u32 %v66, %v67
    %v69 = vshll.u32 2102212464, %v57
    %v70 = vshrl.u32 920167782, %v58
    %v71 = vor.u32 %v69, %v70
    %v72 = vshll.u32 920167782, %v57
    %v73 = vshrl.u32 1326507024, %v58
    %v74 = vor.u32 %v72, %v73
    %vm75 = vcmp.lt.s32.totalorder %v56, 1
    %vm76 = vcmp.lt.s32.totalorder %v56, 2
    %vm77 = vcmp.lt.s32.totalorder %v56, 3
    %vm78 = vcmp.lt.s32.totalorder %v56, 4
    %v79 = vsel %vm75, %v59, %v62
    %v80 = vsel %vm78, %v68, 2102212464
    %v81 = vsel %vm77, %v65, %v80
    %v82 = vsel %vm76, %v79, %v81
    %v83 = vsel %vm75, %v62, %v65
    %v84 = vsel %vm78, %v71, 920167782
    %v85 = vsel %vm77, %v68, %v84
    %v86 = vsel %vm76, %v83, %v85
    %v87 = vsel %vm75, %v65, %v68
    %v88 = vsel %vm78, %v74, 1326507024
    %v89 = vsel %vm77, %v71, %v88
    %v90 = vsel %vm76, %v87, %v89
    %v91 = vshll.u32 %v51, 8
    %v92 = vmul.u32.u64.compose %v91, %v90
    %v93 = vextract.low.u32 %v92
    %v94 = vextract.high.u32 %v92
    %v95 = vmul.u32.u64.compose %v91, %v86
    %v96 = vextract.low.u32 %v95
    %v97 = vextract.high.u32 %v95
    %v98 = vmul.u32 %v91, %v82
    %v99 = vadd.s32 %v94, %v96
    %vm100 = vc.u32 %v94, %v96
    %v101 = vadd.s32 %v97, 1
    %v102 = vsel %vm100, %v101, %v97
    %v103 = vadd.s32 %v98, %v102
    %v104 = vadd.s32 %v103, 536870912
    %v105 = vshrl.u32 %v104, 30
    %v106 = vshll.u32 %v105, 30
    %v107 = vsub.s32 %v103, %v106
    %vm108 = vcmp.lt.s32.totalorder %v107, 0
    %v109 = vsub.s32 0, %v107
    %v110 = vsel %vm108, %v109, %v107
    %v111 = vclz %v110
    %v112 = vsub.s32 %v111, 2
    %vm113 = vcmp.gt.s32.totalorder 0, %v112
    %v114 = vsel %vm113, 0, %v112
    %v115 = vsub.s32 32, %v114
    %v116 = vshll.u32 %v107, %v114
    %v117 = vshrl.u32 %v99, %v115
    %v118 = vor.u32 %v116, %v117
    %v119 = vsub.s32 4294967266, %v114
    %v120 = vadd.s32 %v119, 127
    %v121 = vshll.u32 %v120, 23
    %v122 = vor.u32 4788187, %v121
    %v123 = vand.u32 2147483647, %v122
    %v125 = vcvt.s32.f32 %v118
    %v126 = vmul.f32 %v125, %v123
    %v127 = vxor.u32 %v126, 2147483648
    %v128 = vsel %vm45, %v127, %v126
    %v129 = vsub.s32 4, %v105
    %v130 = vsel %vm45, %v129, %v105
    %v131 = vsel %vm44, %v41, %v128
    %v132 = vsel %vm44, 0, %v130
    %v133 = vcosq.f32.pop %v131
    %v134 = vsinq.f32.pop %v131
    %vm135 = vweird.f32 %v41
    %v136 = vadd.s32 %v132, 3
    %v137 = vand.u32 %v136, 3
    %vm138 = vcmp.lt.s32.totalorder %v137, 2
    %vm139 = vcmp.eq.s32.totalorder %v137, 0
    %v140 = vxor.u32 %v134, 2147483648
    %v141 = vsel %vm139, %v133, %v140
    %vm142 = vcmp.eq.s32.totalorder %v137, 2
    %v143 = vxor.u32 %v133, 2147483648
    %v144 = vsel %vm142, %v143, %v134
    %v145 = vsel %vm138, %v141, %v144
    %v146 = vsel %vm135, nan, %v145
    %v147 = vand.u32 2147483647, %v42
    %vm148 = vcmp.le.f32.partialorder %v147, 0.7853982
    %vm149 = vcmp.lt.s32.totalorder %v42, 0
    %v150 = vand.u32 %v42, 2139095040
    %v151 = vshrl.u32 %v150, 23
    %v152 = vsub.s32 %v151, 127
    %v153 = vand.u32 2147483647, %v42
    %v154 = vand.u32 %v153, 8388607
    %v155 = vor.u32 %v154, 8388608
    %v156 = vsub.s32 0, %v155
    %v157 = vadd.s32 %v152, 1
    %vm158 = vcmp.gt.s32.totalorder %v157, 0
    %v159 = vsel %vm158, %v157, 0
    %v160 = vshrl.u32 %v159, 5
    %v161 = vand.u32 %v159, 31
    %v162 = vsub.s32 32, %v161
    %v163 = vshrl.u32 683565275, %v162
    %v164 = vshll.u32 683565275, %v161
    %v165 = vshrl.u32 2475754826, %v162
    %v166 = vor.u32 %v164, %v165
    %v167 = vshll.u32 2475754826, %v161
    %v168 = vshrl.u32 2131351028, %v162
    %v169 = vor.u32 %v167, %v168
    %v170 = vshll.u32 2131351028, %v161
    %v171 = vshrl.u32 2102212464, %v162
    %v172 = vor.u32 %v170, %v171
    %v173 = vshll.u32 2102212464, %v161
    %v174 = vshrl.u32 920167782, %v162
    %v175 = vor.u32 %v173, %v174
    %v176 = vshll.u32 920167782, %v161
    %v177 = vshrl.u32 1326507024, %v162
    %v178 = vor.u32 %v176, %v177
    %vm179 = vcmp.lt.s32.totalorder %v160, 1
    %vm180 = vcmp.lt.s32.totalorder %v160, 2
    %vm181 = vcmp.lt.s32.totalorder %v160, 3
    %vm182 = vcmp.lt.s32.totalorder %v160, 4
    %v183 = vsel %vm179, %v163, %v166
    %v184 = vsel %vm182, %v172, 2102212464
    %v185 = vsel %vm181, %v169, %v184
    %v186 = vsel %vm180, %v183, %v185
    %v187 = vsel %vm179, %v166, %v169
    %v188 = vsel %vm182, %v175, 920167782
    %v189 = vsel %vm181, %v172, %v188
    %v190 = vsel %vm180, %v187, %v189
    %v191 = vsel %vm179, %v169, %v172
    %v192 = vsel %vm182, %v178, 1326507024
    %v193 = vsel %vm181, %v175, %v192
    %v194 = vsel %vm180, %v191, %v193
    %v195 = vshll.u32 %v155, 8
    %v196 = vmul.u32.u64.compose %v195, %v194
    %v197 = vextract.low.u32 %v196
    %v198 = vextract.high.u32 %v196
    %v199 = vmul.u32.u64.compose %v195, %v190
    %v200 = vextract.low.u32 %v199
    %v201 = vextract.high.u32 %v199
    %v202 = vmul.u32 %v195, %v186
    %v203 = vadd.s32 %v198, %v200
    %vm204 = vc.u32 %v198, %v200
    %v205 = vadd.s32 %v201, 1
    %v206 = vsel %vm204, %v205, %v201
    %v207 = vadd.s32 %v202, %v206
    %v208 = vadd.s32 %v207, 536870912
    %v209 = vshrl.u32 %v208, 30
    %v210 = vshll.u32 %v209, 30
    %v211 = vsub.s32 %v207, %v210
    %vm212 = vcmp.lt.s32.totalorder %v211, 0
    %v213 = vsub.s32 0, %v211
    %v214 = vsel %vm212, %v213, %v211
    %v215 = vclz %v214
    %v216 = vsub.s32 %v215, 2
    %vm217 = vcmp.gt.s32.totalorder 0, %v216
    %v218 = vsel %vm217, 0, %v216
    %v219 = vsub.s32 32, %v218
    %v220 = vshll.u32 %v211, %v218
    %v221 = vshrl.u32 %v203, %v219
    %v222 = vor.u32 %v220, %v221
    %v223 = vsub.s32 4294967266, %v218
    %v224 = vadd.s32 %v223, 127
    %v225 = vshll.u32 %v224, 23
    %v226 = vor.u32 4788187, %v225
    %v227 = vand.u32 2147483647, %v226
    %v229 = vcvt.s32.f32 %v222
    %v230 = vmul.f32 %v229, %v227
    %v231 = vxor.u32 %v230, 2147483648
    %v232 = vsel %vm149, %v231, %v230
    %v233 = vsub.s32 4, %v209
    %v234 = vsel %vm149, %v233, %v209
    %v235 = vsel %vm148, %v42, %v232
    %v236 = vsel %vm148, 0, %v234
    %v237 = vcosq.f32.pop %v235
    %v238 = vsinq.f32.pop %v235
    %vm239 = vweird.f32 %v42
    %v240 = vadd.s32 %v236, 3
    %v241 = vand.u32 %v240, 3
    %vm242 = vcmp.lt.s32.totalorder %v241, 2
    %vm243 = vcmp.eq.s32.totalorder %v241, 0
    %v244 = vxor.u32 %v238, 2147483648
    %v245 = vsel %vm243, %v237, %v244
    %vm246 = vcmp.eq.s32.totalorder %v241, 2
    %v247 = vxor.u32 %v237, 2147483648
    %v248 = vsel %vm246, %v247, %v238
    %v249 = vsel %vm242, %v245, %v248
    %v250 = vsel %vm239, nan, %v249
    %v251 = vand.u32 2147483647, %v41
    %vm252 = vcmp.le.f32.partialorder %v251, 0.7853982
    %vm253 = vcmp.lt.s32.totalorder %v41, 0
    %v254 = vand.u32 %v41, 2139095040
    %v255 = vshrl.u32 %v254, 23
    %v256 = vsub.s32 %v255, 127
    %v257 = vand.u32 2147483647, %v41
    %v258 = vand.u32 %v257, 8388607
    %v259 = vor.u32 %v258, 8388608
    %v260 = vsub.s32 0, %v259
    %v261 = vadd.s32 %v256, 1
    %vm262 = vcmp.gt.s32.totalorder %v261, 0
    %v263 = vsel %vm262, %v261, 0
    %v264 = vshrl.u32 %v263, 5
    %v265 = vand.u32 %v263, 31
    %v266 = vsub.s32 32, %v265
    %v267 = vshrl.u32 683565275, %v266
    %v268 = vshll.u32 683565275, %v265
    %v269 = vshrl.u32 2475754826, %v266
    %v270 = vor.u32 %v268, %v269
    %v271 = vshll.u32 2475754826, %v265
    %v272 = vshrl.u32 2131351028, %v266
    %v273 = vor.u32 %v271, %v272
    %v274 = vshll.u32 2131351028, %v265
    %v275 = vshrl.u32 2102212464, %v266
    %v276 = vor.u32 %v274, %v275
    %v277 = vshll.u32 2102212464, %v265
    %v278 = vshrl.u32 920167782, %v266
    %v279 = vor.u32 %v277, %v278
    %v280 = vshll.u32 920167782, %v265
    %v281 = vshrl.u32 1326507024, %v266
    %v282 = vor.u32 %v280, %v281
    %vm283 = vcmp.lt.s32.totalorder %v264, 1
    %vm284 = vcmp.lt.s32.totalorder %v264, 2
    %vm285 = vcmp.lt.s32.totalorder %v264, 3
    %vm286 = vcmp.lt.s32.totalorder %v264, 4
    %v287 = vsel %vm283, %v267, %v270
    %v288 = vsel %vm286, %v276, 2102212464
    %v289 = vsel %vm285, %v273, %v288
    %v290 = vsel %vm284, %v287, %v289
    %v291 = vsel %vm283, %v270, %v273
    %v292 = vsel %vm286, %v279, 920167782
    %v293 = vsel %vm285, %v276, %v292
    %v294 = vsel %vm284, %v291, %v293
    %v295 = vsel %vm283, %v273, %v276
    %v296 = vsel %vm286, %v282, 1326507024
    %v297 = vsel %vm285, %v279, %v296
    %v298 = vsel %vm284, %v295, %v297
    %v299 = vshll.u32 %v259, 8
    %v300 = vmul.u32.u64.compose %v299, %v298
    %v301 = vextract.low.u32 %v300
    %v302 = vextract.high.u32 %v300
    %v303 = vmul.u32.u64.compose %v299, %v294
    %v304 = vextract.low.u32 %v303
    %v305 = vextract.high.u32 %v303
    %v306 = vmul.u32 %v299, %v290
    %v307 = vadd.s32 %v302, %v304
    %vm308 = vc.u32 %v302, %v304
    %v309 = vadd.s32 %v305, 1
    %v310 = vsel %vm308, %v309, %v305
    %v311 = vadd.s32 %v306, %v310
    %v312 = vadd.s32 %v311, 536870912
    %v313 = vshrl.u32 %v312, 30
    %v314 = vshll.u32 %v313, 30
    %v315 = vsub.s32 %v311, %v314
    %vm316 = vcmp.lt.s32.totalorder %v315, 0
    %v317 = vsub.s32 0, %v315
    %v318 = vsel %vm316, %v317, %v315
    %v319 = vclz %v318
    %v320 = vsub.s32 %v319, 2
    %vm321 = vcmp.gt.s32.totalorder 0, %v320
    %v322 = vsel %vm321, 0, %v320
    %v323 = vsub.s32 32, %v322
    %v324 = vshll.u32 %v315, %v322
    %v325 = vshrl.u32 %v307, %v323
    %v326 = vor.u32 %v324, %v325
    %v327 = vsub.s32 4294967266, %v322
    %v328 = vadd.s32 %v327, 127
    %v329 = vshll.u32 %v328, 23
    %v330 = vor.u32 4788187, %v329
    %v331 = vand.u32 2147483647, %v330
    %v333 = vcvt.s32.f32 %v326
    %v334 = vmul.f32 %v333, %v331
    %v335 = vxor.u32 %v334, 2147483648
    %v336 = vsel %vm253, %v335, %v334
    %v337 = vsub.s32 4, %v313
    %v338 = vsel %vm253, %v337, %v313
    %v339 = vsel %vm252, %v41, %v336
    %v340 = vsel %vm252, 0, %v338
    %v341 = vcosq.f32.pop %v339
    %v342 = vsinq.f32.pop %v339
    %vm343 = vweird.f32 %v41
    %v344 = vand.u32 %v340, 3
    %vm345 = vcmp.lt.s32.totalorder %v344, 2
    %vm346 = vcmp.eq.s32.totalorder %v344, 0
    %v347 = vxor.u32 %v342, 2147483648
    %v348 = vsel %vm346, %v341, %v347
    %vm349 = vcmp.eq.s32.totalorder %v344, 2
    %v350 = vxor.u32 %v341, 2147483648
    %v351 = vsel %vm349, %v350, %v342
    %v352 = vsel %vm345, %v348, %v351
    %v353 = vsel %vm343, nan, %v352
    %v354 = vand.u32 2147483647, %v42
    %vm355 = vcmp.le.f32.partialorder %v354, 0.7853982
    %vm356 = vcmp.lt.s32.totalorder %v42, 0
    %v357 = vand.u32 %v42, 2139095040
    %v358 = vshrl.u32 %v357, 23
    %v359 = vsub.s32 %v358, 127
    %v360 = vand.u32 2147483647, %v42
    %v361 = vand.u32 %v360, 8388607
    %v362 = vor.u32 %v361, 8388608
    %v363 = vsub.s32 0, %v362
    %v364 = vadd.s32 %v359, 1
    %vm365 = vcmp.gt.s32.totalorder %v364, 0
    %v366 = vsel %vm365, %v364, 0
    %v367 = vshrl.u32 %v366, 5
    %v368 = vand.u32 %v366, 31
    %v369 = vsub.s32 32, %v368
    %v370 = vshrl.u32 683565275, %v369
    %v371 = vshll.u32 683565275, %v368
    %v372 = vshrl.u32 2475754826, %v369
    %v373 = vor.u32 %v371, %v372
    %v374 = vshll.u32 2475754826, %v368
    %v375 = vshrl.u32 2131351028, %v369
    %v376 = vor.u32 %v374, %v375
    %v377 = vshll.u32 2131351028, %v368
    %v378 = vshrl.u32 2102212464, %v369
    %v379 = vor.u32 %v377, %v378
    %v380 = vshll.u32 2102212464, %v368
    %v381 = vshrl.u32 920167782, %v369
    %v382 = vor.u32 %v380, %v381
    %v383 = vshll.u32 920167782, %v368
    %v384 = vshrl.u32 1326507024, %v369
    %v385 = vor.u32 %v383, %v384
    %vm386 = vcmp.lt.s32.totalorder %v367, 1
    %vm387 = vcmp.lt.s32.totalorder %v367, 2
    %vm388 = vcmp.lt.s32.totalorder %v367, 3
    %vm389 = vcmp.lt.s32.totalorder %v367, 4
    %v390 = vsel %vm386, %v370, %v373
    %v391 = vsel %vm389, %v379, 2102212464
    %v392 = vsel %vm388, %v376, %v391
    %v393 = vsel %vm387, %v390, %v392
    %v394 = vsel %vm386, %v373, %v376
    %v395 = vsel %vm389, %v382, 920167782
    %v396 = vsel %vm388, %v379, %v395
    %v397 = vsel %vm387, %v394, %v396
    %v398 = vsel %vm386, %v376, %v379
    %v399 = vsel %vm389, %v385, 1326507024
    %v400 = vsel %vm388, %v382, %v399
    %v401 = vsel %vm387, %v398, %v400
    %v402 = vshll.u32 %v362, 8
    %v403 = vmul.u32.u64.compose %v402, %v401
    %v404 = vextract.low.u32 %v403
    %v405 = vextract.high.u32 %v403
    %v406 = vmul.u32.u64.compose %v402, %v397
    %v407 = vextract.low.u32 %v406
    %v408 = vextract.high.u32 %v406
    %v409 = vmul.u32 %v402, %v393
    %v410 = vadd.s32 %v405, %v407
    %vm411 = vc.u32 %v405, %v407
    %v412 = vadd.s32 %v408, 1
    %v413 = vsel %vm411, %v412, %v408
    %v414 = vadd.s32 %v409, %v413
    %v415 = vadd.s32 %v414, 536870912
    %v416 = vshrl.u32 %v415, 30
    %v417 = vshll.u32 %v416, 30
    %v418 = vsub.s32 %v414, %v417
    %vm419 = vcmp.lt.s32.totalorder %v418, 0
    %v420 = vsub.s32 0, %v418
    %v421 = vsel %vm419, %v420, %v418
    %v422 = vclz %v421
    %v423 = vsub.s32 %v422, 2
    %vm424 = vcmp.gt.s32.totalorder 0, %v423
    %v425 = vsel %vm424, 0, %v423
    %v426 = vsub.s32 32, %v425
    %v427 = vshll.u32 %v418, %v425
    %v428 = vshrl.u32 %v410, %v426
    %v429 = vor.u32 %v427, %v428
    %v430 = vsub.s32 4294967266, %v425
    %v431 = vadd.s32 %v430, 127
    %v432 = vshll.u32 %v431, 23
    %v433 = vor.u32 4788187, %v432
    %v434 = vand.u32 2147483647, %v433
    %v436 = vcvt.s32.f32 %v429
    %v437 = vmul.f32 %v436, %v434
    %v438 = vxor.u32 %v437, 2147483648
    %v439 = vsel %vm356, %v438, %v437
    %v440 = vsub.s32 4, %v416
    %v441 = vsel %vm356, %v440, %v416
    %v442 = vsel %vm355, %v42, %v439
    %v443 = vsel %vm355, 0, %v441
    %v444 = vcosq.f32.pop %v442
    %v445 = vsinq.f32.pop %v442
    %vm446 = vweird.f32 %v42
    %v447 = vand.u32 %v443, 3
    %vm448 = vcmp.lt.s32.totalorder %v447, 2
    %vm449 = vcmp.eq.s32.totalorder %v447, 0
    %v450 = vxor.u32 %v445, 2147483648
    %v451 = vsel %vm449, %v444, %v450
    %vm452 = vcmp.eq.s32.totalorder %v447, 2
    %v453 = vxor.u32 %v444, 2147483648
    %v454 = vsel %vm452, %v453, %v445
    %v455 = vsel %vm448, %v451, %v454
    %v456 = vsel %vm446, nan, %v455
    %459 = vrot.lane.b32.xlu0 %v353, 16
    %v460 = vpop.permute.xlu0 %459
    %461 = vrot.lane.b32.xlu0 %v456, 16
    %v462 = vpop.permute.xlu0 %461
    %vm465 = vcmask 130048
    %v466 = vsel %vm465, %v146, %v460
    %v467 = vsel %vm465, %v250, %v462
    %vm468 = vcmask 261120
    %469 = vst.msk [vmem:[#allocation5] sm:$0xff] %vm468, %v466
    %470 = vst.msk [vmem:[#allocation5 + $0x8] sm:$0xff] %vm468, %v467
    %v471 = vsel %vm465, %v353, %v460
    %v472 = vsel %vm465, %v456, %v462
    %473 = vst.msk [vmem:[#allocation6] sm:$0xff] %vm468, %v471
    %474 = vst.msk [vmem:[#allocation6 + $0x8] sm:$0xff] %vm468, %v472
    %477 = vrot.lane.b32.xlu0 %v146, 16
    %v478 = vpop.permute.xlu0 %477
    %479 = vrot.lane.b32.xlu0 %v250, 16
    %v480 = vpop.permute.xlu0 %479
    %v483 = vsel %vm465, %v146, %v478
    %v484 = vsel %vm465, %v250, %v480
    %485 = vst.msk [vmem:[#allocation8] sm:$0xff] %vm468, %v483
    %486 = vst.msk [vmem:[#allocation8 + $0x8] sm:$0xff] %vm468, %v484
    // Predicated region
    $region10: #{tpu_custom_call.1} parent=1 // pred_check
      _
    $region11: #{tpu_custom_call.1} parent=1 // pred_check_branch
      %488 = sbr.rel (0) target = $region13
    $region12: #{tpu_custom_call.1} parent=1 // pred_region
      %s490 = ssub.s32 256, 256
      %491 = vsyncadd [#allocation4], %s490
      %s492 = sshll.u32 [#allocation5], 4
      %s493 = int_to_ptr.vmem [resolvable:$true] %s492
      %498 = dma.vmem_to_hbm [thread:$0]  %s493, 256, %s1, [#allocation4], 128, 128, 8
    $region13: #{tpu_custom_call.1} parent=1 // pred_fallthru
      _
    // Predicated region
    $region14: #{tpu_custom_call.1} parent=1 // pred_check
      _
    $region15: #{tpu_custom_call.1} parent=1 // pred_check_branch
      %500 = sbr.rel (0) target = $region17
    $region16: #{tpu_custom_call.1} parent=1 // pred_region
      %s502 = ssub.s32 256, 256
      %503 = vsyncadd [#allocation7], %s502
      %s504 = sshll.u32 [#allocation6], 4
      %s505 = int_to_ptr.vmem [resolvable:$true] %s504
      %510 = dma.vmem_to_hbm [thread:$0]  %s505, 256, %s2, [#allocation7], 128, 128, 8
    $region17: #{tpu_custom_call.1} parent=1 // pred_fallthru
      _
    // Predicated region
    $region18: #{tpu_custom_call.1} parent=1 // pred_check
      _
    $region19: #{tpu_custom_call.1} parent=1 // pred_check_branch
      %512 = sbr.rel (0) target = $region21
    $region20: #{tpu_custom_call.1} parent=1 // pred_region
      %s514 = ssub.s32 256, 256
      %515 = vsyncadd [#allocation7], %s514
      %s516 = sshll.u32 [#allocation8], 4
      %s517 = int_to_ptr.vmem [resolvable:$true] %s516
      %522 = dma.vmem_to_hbm [thread:$0]  %s517, 256, %s3, [#allocation7], 128, 128, 8
    $region21: #{tpu_custom_call.1} parent=1 // pred_fallthru
      _
    // Predicated region
    $region22: #{tpu_custom_call.1} parent=1 // pred_check
      _
    $region23: #{tpu_custom_call.1} parent=1 // pred_check_branch
      %524 = sbr.rel (0) target = $region25
    $region24: #{tpu_custom_call.1} parent=1 // pred_region
      %525 = dma.done [#allocation4], 256
    $region25: #{tpu_custom_call.1} parent=1 // pred_fallthru
      _
    // Predicated region
    $region26: #{tpu_custom_call.1} parent=1 // pred_check
      _
    $region27: #{tpu_custom_call.1} parent=1 // pred_check_branch
      %527 = sbr.rel (0) target = $region29
    $region28: #{tpu_custom_call.1} parent=1 // pred_region
      %528 = dma.done [#allocation7], 256
    $region29: #{tpu_custom_call.1} parent=1 // pred_fallthru
      _
    // Predicated region
    $region30: #{tpu_custom_call.1} parent=1 // pred_check
      _
    $region31: #{tpu_custom_call.1} parent=1 // pred_check_branch
      %530 = sbr.rel (0) target = $region33
    $region32: #{tpu_custom_call.1} parent=1 // pred_region
      %531 = dma.done [#allocation7], 256
    $region33: #{tpu_custom_call.1} parent=1 // pred_fallthru
      _
    %532 = vsyncpa [#allocation3], 1
    %533 = vsyncpa [#allocation4], 1
    %534 = vsyncpa [#allocation7], 1

</llo_original>
